<compile_context>
chip_gen: v5e
topology: v5e:2x2
jax: 0.10.0
libtpu: 0.0.40
codegen_flags: <defaults>
</compile_context>

<pallas_src>
import jax
import jax.numpy as jnp
from jax.experimental import pallas as pl
from jax.experimental.pallas import tpu as pltpu

_LANE = 128
_SUBLANE = 8


def _pe_add_kernel(x_ref, pe_ref, o_ref):
    # Pure VPU elementwise add; in-register casts are free in this memory-bound regime.
    o_ref[...] = x_ref[...].astype(o_ref.dtype) + pe_ref[...].astype(o_ref.dtype)


def _vmem_params():
    """(vmem_limit_bytes, per_buffer_cap_bytes), generation-aware.

    v5e/v6e: 128 MiB physical VMEM -> raise scoped limit to 64 MiB, ~8 MiB per tile
             (6 live buffers worst case = 48 MiB).
    v7x:     64 MiB physical VMEM  -> keep 32 MiB scoped limit, ~4 MiB per tile
             (6 live buffers worst case = 24 MiB).
    """
    phys = None
    try:
        info = pltpu.get_tpu_info()
        phys = getattr(info, "vmem_capacity_bytes", None)
    except Exception:
        phys = None
    if phys is not None and phys >= 100 * 1024 * 1024:
        return 64 * 1024 * 1024, 8 * 1024 * 1024
    return 32 * 1024 * 1024, 4 * 1024 * 1024


def _widest_lane_width(total, max_lanes=4096):
    """Largest multiple of 128 that divides `total`, capped at `max_lanes`."""
    l = min(max_lanes, total)
    l -= l % _LANE
    while l >= _LANE:
        if total % l == 0:
            return l
        l -= _LANE
    return _LANE


def positional_embedding_forward(x, pe_weight, *, donate_x=False):
    """x: (B, S, E); pe_weight: (num_embeddings, E) with num_embeddings == S."""
    B, S, E = x.shape
    assert pe_weight.shape == (S, E), (
        "PyTorch broadcasting in the reference module requires seq_len == num_embeddings"
    )

    # Match PyTorch type promotion (e.g. bf16 x + f32 embedding -> f32 result).
    out_dtype = jnp.promote_types(x.dtype, pe_weight.dtype)
    itemsize = jnp.dtype(out_dtype).itemsize

    total = S * E
    flattened = total % _LANE == 0
    padded = False
    if flattened:
        # Lane-dense canonical view: flatten (S, E) -> (R, L) with the widest L possible.
        L = _widest_lane_width(total)
        R = total // L
        x_c = x.reshape(B, R, L)
        pe_c = pe_weight.reshape(R, L)
    else:
        E_pad = -(-E // _LANE) * _LANE
        if E_pad <= 2 * E:
            # Pad to a 128-lane boundary: one extra wrapper pass over x, but every kernel
            # store becomes a full unmasked `vst` and DMAs stay contiguous.
            padded = True
            x_c = jnp.pad(x, ((0, 0), (0, 0), (0, E_pad - E)))
            pe_c = jnp.pad(pe_weight, ((0, 0), (0, E_pad - E)))
            R, L = S, E_pad
        else:
            # TODO(synk): genuinely tiny E -- accept masked partial-lane stores rather than
            # more than doubling HBM traffic with lane padding.
            x_c, pe_c = x, pe_weight
            R, L = S, E

    vmem_limit, per_buf_cap = _vmem_params()

    # Keep pe fully VMEM-resident (one DMA for the whole kernel) when it is small.
    pe_bytes = R * L * jnp.dtype(pe_c.dtype).itemsize
    pe_resident = pe_bytes <= min(4 * 1024 * 1024, per_buf_cap)

    # Row tile sized so each buffer is a few MiB (per-generation cap), multiple of 8 sublanes.
    max_rows = max(1, per_buf_cap // (L * itemsize))
    tR = min(R, max_rows)
    if R >= _SUBLANE:
        tR = max(_SUBLANE, tR - tR % _SUBLANE)
    else:
        tR = R

    # v7x megacore: keep >= 2 parallel work units when B == 1 by splitting rows 2-ways.
    if B == 1 and pl.cdiv(R, tR) == 1 and R >= 2 * _SUBLANE:
        half = -(-R // 2)
        tR = -(-half // _SUBLANE) * _SUBLANE

    num_row_tiles = pl.cdiv(R, tR)
    grid = (num_row_tiles, B)  # batch innermost: pe block index constant across batches

    if pe_resident:
        pe_spec = pl.BlockSpec((R, L), lambda r, b: (0, 0))       # DMA'd once, stays resident
    else:
        pe_spec = pl.BlockSpec((tR, L), lambda r, b: (r, 0))      # reused across the batch axis

    # Donation only composes when the output buffer has the same dtype as the (bitcast) input.
    input_output_aliases = {0: 0} if (donate_x and out_dtype == x_c.dtype) else {}

    out = pl.pallas_call(
        _pe_add_kernel,
        out_shape=jax.ShapeDtypeStruct((B, R, L), out_dtype),
        grid_spec=pltpu.PrefetchScalarGridSpec(
            num_scalar_prefetch=0,
            grid=grid,
            in_specs=[
                # x: one (tR, L) tile of one batch row per step (leading batch dim squeezed)
                pl.BlockSpec((None, tR, L), lambda r, b: (b, r, 0)),
                pe_spec,
            ],
            out_specs=pl.BlockSpec((None, tR, L), lambda r, b: (b, r, 0)),
        ),
        compiler_params=pltpu.CompilerParams(
            dimension_semantics=("parallel", "parallel"),
            vmem_limit_bytes=vmem_limit,
        ),
        input_output_aliases=input_output_aliases,
    )(x_c, pe_c)

    if flattened:
        return out.reshape(B, S, E)
    if padded:
        return out[:, :, :E]
    return out


if __name__ == "__main__":
    # Small, module-consistent shapes: batch=2, seq_len = num_embeddings = 8, embedding_dim=32
    B, S, E = 2, 8, 32
    num_embeddings = S  # required for the reference module's broadcast to be valid

    key = jax.random.PRNGKey(0)
    kx, kw = jax.random.split(key)
    x = jax.random.normal(kx, (B, S, E), dtype=jnp.float32)
    # Deterministic synthetic init of nn.Embedding(num_embeddings, embedding_dim).weight
    pe_weight = jax.random.normal(kw, (num_embeddings, E), dtype=jnp.float32)

    out = positional_embedding_forward(x, pe_weight)
    out = jax.block_until_ready(out)

    # Pure-JAX reference of the PyTorch forward
    ref = x + pe_weight[None, :, :]
    assert out.shape == (B, S, E)
    assert out.dtype == ref.dtype
    assert jnp.allclose(out, ref, atol=1e-6), "mismatch vs reference"

    print("KERNEL_OK")
</pallas_src>

<mosaic_0001>
module attributes {stable_mosaic.version = 11 : i64} {
  func.func @_pe_add_kernel(%arg0: i32, %arg1: i32, %arg2: memref<1x1x256xf32, #tpu.memory_space<vmem>>, %arg3: memref<1x256xf32, #tpu.memory_space<vmem>>, %arg4: memref<1x1x256xf32, #tpu.memory_space<vmem>>) attributes {dimension_semantics = [#tpu.dimension_semantics<parallel>, #tpu.dimension_semantics<parallel>], iteration_bounds = array<i64: 1, 2>, scalar_prefetch = 0 : i64, scratch_operands = 0 : i64, tpu.core_type = #tpu.core_type<tc>, window_params = [{transform_indices = @transform_0, window_bounds = array<i64: 1, 1, 256>}, {pipeline_mode = #tpu.pipeline_mode<synchronous>, transform_indices = @transform_1, window_bounds = array<i64: 1, 256>}, {transform_indices = @transform_2, window_bounds = array<i64: 1, 1, 256>}]} {
    %c0 = arith.constant 0 : index
    %c0_0 = arith.constant 0 : index
    %c0_1 = arith.constant 0 : index
    %0 = vector.load %arg2[%c0, %c0_0, %c0_1] : memref<1x1x256xf32, #tpu.memory_space<vmem>>, vector<1x1x256xf32>
    %1 = vector.shape_cast %0 : vector<1x1x256xf32> to vector<1x256xf32>
    %c0_2 = arith.constant 0 : index
    %c0_3 = arith.constant 0 : index
    %2 = vector.load %arg3[%c0_2, %c0_3] : memref<1x256xf32, #tpu.memory_space<vmem>>, vector<1x256xf32>
    %3 = arith.addf %1, %2 : vector<1x256xf32>
    %c0_4 = arith.constant 0 : index
    %c0_5 = arith.constant 0 : index
    %c0_6 = arith.constant 0 : index
    %4 = vector.load %arg4[%c0_4, %c0_5, %c0_6] : memref<1x1x256xf32, #tpu.memory_space<vmem>>, vector<1x1x256xf32>
    %5 = vector.shape_cast %4 : vector<1x1x256xf32> to vector<1x256xf32>
    %6 = vector.shape_cast %3 : vector<1x256xf32> to vector<1x1x256xf32>
    tpu.vector_store %arg4[%c0_4, %c0_5, %c0_6], %6 {strides = array<i32>} : memref<1x1x256xf32, #tpu.memory_space<vmem>>, vector<1x1x256xf32>,
    return
  }
  func.func @transform_0(%arg0: i32, %arg1: i32) -> (i32, i32, i32) {
    %c0_i32 = arith.constant 0 : i32
    %c0_i32_0 = arith.constant 0 : i32
    return %arg1, %arg0, %c0_i32 : i32, i32, i32
  }
  func.func @transform_1(%arg0: i32, %arg1: i32) -> (i32, i32) {
    %c0_i32 = arith.constant 0 : i32
    %c0_i32_0 = arith.constant 0 : i32
    %c0_i32_1 = arith.constant 0 : i32
    return %c0_i32, %c0_i32_0 : i32, i32
  }
  func.func @transform_2(%arg0: i32, %arg1: i32) -> (i32, i32, i32) {
    %c0_i32 = arith.constant 0 : i32
    %c0_i32_0 = arith.constant 0 : i32
    return %arg1, %arg0, %c0_i32 : i32, i32, i32
  }
}

</mosaic_0001>

<llo_original>
// kernel: tpu_custom_call.1
$region0: #{tpu_custom_call.1}
  #allocation0 [shape = 'u32[]', space=smem, size = 0x4, offset = 0x4, fixed_abs, tag = 'smem constant byte address 0x4 - core index']
  #allocation1 [shape = 'u32[72,128]{1,0:T(1,128)}', space=vmem, size = 0x9000, scoped, tag = 'internal scratch']
  %s0 = inlined_call_operand.hbm [shape: f32[2,1,256], index: 0, kind: input, shape index: {}]
  %s1 = inlined_call_operand.hbm [shape: f32[1,256], index: 1, kind: input, shape index: {}]
  %s2 = inlined_call_operand.hbm [shape: f32[2,1,256], index: 2, kind: output, shape index: {}]
  %s3 = sld [smem:[#allocation0]]
  $region49: #{tpu_custom_call.1} parent=0
    _
  %s5 = ssub.s32 1, %s3
  %s6 = scalar_select 0, %s5, %s3
  $region1: #{tpu_custom_call.1} parent=0
    #allocation2 [shape = 'u8[2048]{0}', space=vmem, size = 0x800, scoped, tag = 'input window, operand 0']
    #allocation3 [shape = 's32[2]{0}', space=sflag, size = 0x8, scoped, tag = 'scoped memory for tpu_custom_call.1']
    #allocation4 [shape = 's32[2]{0}', space=sflag, size = 0x8, scoped, tag = 'scoped memory for tpu_custom_call.1']
    #allocation5 [shape = 'u8[1024]{0}', space=vmem, size = 0x400, scoped, tag = 'input window, operand 1, single buffered']
    #allocation6 [shape = 's32[1]{0}', space=sflag, size = 0x4, scoped, tag = 'scoped memory for tpu_custom_call.1']
    #allocation7 [shape = 'u8[2048]{0}', space=vmem, size = 0x800, scoped, tag = 'output window, operand 0']
    %7 = vsyncpa [#allocation3], 0
    %s8 = scalar_lea.sflag [#allocation3], 1
    %9 = vsyncpa %s8, 0
    %10 = vsyncpa [#allocation6], 0
    %11 = vsyncpa [#allocation4], 0
    %s12 = scalar_lea.sflag [#allocation4], 1
    %13 = vsyncpa %s12, 0
    loop: start=0, step=1, limit=4
    $region2: #{tpu_custom_call.1} parent=1 // loop_pre_header
      _
    $region3: #{tpu_custom_call.1} parent=1 // loop_header
      %s15 = sphi 0, %s19
      %p16 = scmp.ge.s32.totalorder %s15, 4
      %s22 = sphi 0, %s34
      %s23 = sphi 0, %s30
      %s24 = sphi 0, %s22
      %s25 = sphi 0, %s23
      %s26 = sphi 0, %s24
      %s27 = sphi 0, %s25
      %s39 = sphi 0, %s41
      %s42 = sphi 0, %s39
      %s43 = sphi 0, %s42
      %s59 = sphi 0, %s43
      %s63 = sphi 0, %s63
      %s65 = sphi 0, %s63
      %s66 = sphi 0, %s65
      %s80 = sphi 0, %s66
      %s88 = sphi 0, %s90
      %s91 = sphi 0, %s88
      %s92 = sphi 0, %s91
      %s108 = sphi 0, %s92
    $region4: #{tpu_custom_call.1} parent=1 // loop_header_branch
      %18 = sbr.rel (%p16) target = $region8
    $region5: #{tpu_custom_call.1} parent=1 // loop_body
      %s20 = ssub.s32 %s15, 1
      %s21 = ssub.s32 %s15, 2
      %s28 = sadd.s32 1, %s23
      %p29 = scmp.ge.s32.totalorder %s28, 2
      %s30 = scalar_select %p29, 0, %s28
      %s31 = sadd.s32 1, %s22
      %s32 = scalar_select %p29, %s31, %s22
      %p33 = scmp.ge.s32.totalorder %s32, 1
      %s34 = scalar_select %p33, 0, %s32
      %s35 = ssub.s32 %s23, %s30
      %s36 = ssub.s32 %s22, %s34
      %s37 = sor.u32 %s35, %s36
      %p38 = scmp.eq.s32.totalorder %s37, 0
      %s40 = sadd.s32 %s39, 1
      %s41 = scalar_select %p38, %s39, %s40
      %p44 = pneg %p38
      %p45 = scmp.eq.s32.totalorder %s15, 1
      %p46 = por %p44, %p45
      %p47 = scmp.ne.s32.totalorder %s39, %s42
      %p48 = scmp.eq.s32.totalorder %s15, 0
      %p49 = por %p47, %p48
      %p50 = scmp.ne.s32.totalorder %s39, %s42
      %p51 = scmp.eq.s32.totalorder %s20, 1
      %p52 = por %p50, %p51
      %p53 = scmp.ne.s32.totalorder %s42, %s43
      %p54 = scmp.eq.s32.totalorder %s20, 0
      %p55 = por %p53, %p54
      %p56 = scmp.ne.s32.totalorder %s42, %s43
      %p57 = scmp.eq.s32.totalorder %s21, 1
      %p58 = por %p56, %p57
      %p60 = scmp.ne.s32.totalorder %s43, %s59
      %p61 = scmp.eq.s32.totalorder %s21, 0
      %p62 = por %p60, %p61
      %s64 = sadd.s32 %s63, 1
      %p67 = scmp.eq.s32.totalorder %s15, 1
      %p68 = scmp.ne.s32.totalorder %s63, %s65
      %p69 = scmp.eq.s32.totalorder %s15, 0
      %p70 = por %p68, %p69
      %p71 = scmp.ne.s32.totalorder %s63, %s65
      %p72 = scmp.eq.s32.totalorder %s20, 1
      %p73 = por %p71, %p72
      %p74 = scmp.ne.s32.totalorder %s65, %s66
      %p75 = scmp.eq.s32.totalorder %s20, 0
      %p76 = por %p74, %p75
      %p77 = scmp.ne.s32.totalorder %s65, %s66
      %p78 = scmp.eq.s32.totalorder %s21, 1
      %p79 = por %p77, %p78
      %p81 = scmp.ne.s32.totalorder %s66, %s80
      %p82 = scmp.eq.s32.totalorder %s21, 0
      %p83 = por %p81, %p82
      %s84 = ssub.s32 %s23, %s30
      %s85 = ssub.s32 %s22, %s34
      %s86 = sor.u32 %s84, %s85
      %p87 = scmp.eq.s32.totalorder %s86, 0
      %s89 = sadd.s32 %s88, 1
      %s90 = scalar_select %p87, %s88, %s89
      %p93 = pneg %p87
      %p94 = scmp.eq.s32.totalorder %s15, 1
      %p95 = por %p93, %p94
      %p96 = scmp.ne.s32.totalorder %s88, %s91
      %p97 = scmp.eq.s32.totalorder %s15, 0
      %p98 = por %p96, %p97
      %p99 = scmp.ne.s32.totalorder %s88, %s91
      %p100 = scmp.eq.s32.totalorder %s20, 1
      %p101 = por %p99, %p100
      %p102 = scmp.ne.s32.totalorder %s91, %s92
      %p103 = scmp.eq.s32.totalorder %s20, 0
      %p104 = por %p102, %p103
      %p105 = scmp.ne.s32.totalorder %s91, %s92
      %p106 = scmp.eq.s32.totalorder %s21, 1
      %p107 = por %p105, %p106
      %p109 = scmp.ne.s32.totalorder %s92, %s108
      %p110 = scmp.eq.s32.totalorder %s21, 0
      %p111 = por %p109, %p110
      %p112 = scmp.le.s32.totalorder 1, %s15
      %p113 = scmp.lt.s32.totalorder %s15, 3
      %p114 = pnand %p112, %p113
      %p115 = pneg %p114
      // Predicated region
      $region9: #{tpu_custom_call.1} parent=5 // pred_check
        _
      $region10: #{tpu_custom_call.1} parent=5 // pred_check_branch
        %117 = sbr.rel (%p114) target = $region12
      $region11: #{tpu_custom_call.1} parent=5 // pred_region
        %s118 = ssub.s32 %s15, 1
        // Predicated region
        $region13: #{tpu_custom_call.1} parent=11 // pred_check
          %p119 = pneg %p76
        $region14: #{tpu_custom_call.1} parent=11 // pred_check_branch
          %121 = sbr.rel (%p119) target = $region16
        $region15: #{tpu_custom_call.1} parent=11 // pred_region
          %123 = vsyncadd [#allocation6], 0
          %s125 = sshll.u32 %s1, 4
          %s126 = int_to_ptr.hbm [resolvable:$true] %s125
          %s127 = sshll.u32 [#allocation5], 4
          %s128 = int_to_ptr.vmem [resolvable:$true] %s127
          %130 = dma.hbm_to_vmem [thread:$0]  %s126, 32, %s128, [#allocation6]
        $region16: #{tpu_custom_call.1} parent=11 // pred_fallthru
          _
      $region12: #{tpu_custom_call.1} parent=5 // pred_fallthru
        _
      %p131 = scmp.lt.s32.totalorder %s15, 2
      // Predicated region
      $region17: #{tpu_custom_call.1} parent=5 // pred_check
        %p132 = pneg %p131
      $region18: #{tpu_custom_call.1} parent=5 // pred_check_branch
        %134 = sbr.rel (%p132) target = $region20
      $region19: #{tpu_custom_call.1} parent=5 // pred_region
        // Predicated region
        $region21: #{tpu_custom_call.1} parent=19 // pred_check
          %p135 = pneg %p49
        $region22: #{tpu_custom_call.1} parent=19 // pred_check_branch
          %137 = sbr.rel (%p135) target = $region24
        $region23: #{tpu_custom_call.1} parent=19 // pred_region
          %s138 = sand.u32 %s39, 1
          %s139 = scalar_lea.sflag [#allocation3], %s138
          %s140 = sand.u32 %s39, 1
          %s141 = smul.addr %s140, 2
          %s142 = scalar_lea.vmem [#allocation2], %s141
          %144 = vsyncadd %s139, 0
          %s145 = smul.addr %s22, 2
          %s146 = smul.addr %s23, 2
          %s147 = sadd.s32 %s145, %s146
          %s148 = scalar_lea.hbm %s0, %s147
          %s150 = sshll.u32 %s148, 4
          %s151 = int_to_ptr.hbm [resolvable:$true] %s150
          %s152 = sshll.u32 %s142, 4
          %s153 = int_to_ptr.vmem [resolvable:$true] %s152
          %155 = dma.hbm_to_vmem [thread:$0]  %s151, 32, %s153, %s139
        $region24: #{tpu_custom_call.1} parent=19 // pred_fallthru
          _
      $region20: #{tpu_custom_call.1} parent=5 // pred_fallthru
        _
      %p156 = scmp.le.s32.totalorder 1, %s15
      %p157 = scmp.lt.s32.totalorder %s15, 3
      %p158 = pnand %p156, %p157
      %p159 = pneg %p158
      // Predicated region
      $region25: #{tpu_custom_call.1} parent=5 // pred_check
        _
      $region26: #{tpu_custom_call.1} parent=5 // pred_check_branch
        %161 = sbr.rel (%p158) target = $region28
      $region27: #{tpu_custom_call.1} parent=5 // pred_region
        %s162 = ssub.s32 %s15, 1
        %s163 = sand.u32 %s42, 1
        %s164 = scalar_lea.sflag [#allocation3], %s163
        %s165 = sand.u32 %s42, 1
        %s166 = smul.addr %s165, 2
        %s167 = scalar_lea.vmem [#allocation2], %s166
        // Predicated region
        $region29: #{tpu_custom_call.1} parent=27 // pred_check
          %p168 = pneg %p55
        $region30: #{tpu_custom_call.1} parent=27 // pred_check_branch
          %170 = sbr.rel (%p168) target = $region32
        $region31: #{tpu_custom_call.1} parent=27 // pred_region
          %172 = dma.done %s164, 32
        $region32: #{tpu_custom_call.1} parent=27 // pred_fallthru
          _
        // Predicated region
        $region33: #{tpu_custom_call.1} parent=27 // pred_check
          %p173 = pneg %p76
        $region34: #{tpu_custom_call.1} parent=27 // pred_check_branch
          %175 = sbr.rel (%p173) target = $region36
        $region35: #{tpu_custom_call.1} parent=27 // pred_region
          %177 = dma.done [#allocation6], 32
        $region36: #{tpu_custom_call.1} parent=27 // pred_fallthru
          _
        %s178 = sand.u32 %s42, 1
        %s179 = scalar_lea.sflag [#allocation3], %s178
        %s180 = sand.u32 %s42, 1
        %s181 = smul.addr %s180, 2
        %s182 = scalar_lea.vmem [#allocation2], %s181
        %p183 = pneg %p55
        %p184 = pneg %p52
        %p185 = pneg %p76
        %p186 = pneg %p73
        %p187 = pneg %p104
        %p188 = pneg %p101
        %s189 = sand.u32 %s91, 1
        %s190 = scalar_lea.sflag [#allocation4], %s189
        %s191 = sand.u32 %s91, 1
        %s192 = smul.addr %s191, 2
        %s193 = scalar_lea.vmem [#allocation7], %s192
        %v194 = vld [vmem:[%s167] sm:$0x3]
        %v195 = vld [vmem:[#allocation5] sm:$0x3]
        %v196 = vadd.f32 %v194, %v195
        %v197 = vlaneseq
        %vm198 = vcmp.ge.s32.totalorder %v197, 0
        %vm199 = vcmp.lt.s32.totalorder %v197, 256
        %vm200 = vmand %vm198, %vm199
        %201 = vst.msk [vmem:[%s193] sm:$0x3] %vm200, %v196
        %s202 = sand.u32 %s91, 1
        %s203 = scalar_lea.sflag [#allocation4], %s202
        %s204 = sand.u32 %s91, 1
        %s205 = smul.addr %s204, 2
        %s206 = scalar_lea.vmem [#allocation7], %s205
        // Predicated region
        $region37: #{tpu_custom_call.1} parent=27 // pred_check
          %p207 = pneg %p101
        $region38: #{tpu_custom_call.1} parent=27 // pred_check_branch
          %209 = sbr.rel (%p207) target = $region40
        $region39: #{tpu_custom_call.1} parent=27 // pred_region
          %211 = vsyncadd %s203, 0
          %s212 = smul.addr %s24, 2
          %s213 = smul.addr %s25, 2
          %s214 = sadd.s32 %s212, %s213
          %s215 = scalar_lea.hbm %s2, %s214
          %s217 = sshll.u32 %s206, 4
          %s218 = int_to_ptr.vmem [resolvable:$true] %s217
          %s219 = sshll.u32 %s215, 4
          %s220 = int_to_ptr.hbm [resolvable:$true] %s219
          %222 = dma.vmem_to_hbm [thread:$0]  %s218, 32, %s220, %s203
        $region40: #{tpu_custom_call.1} parent=27 // pred_fallthru
          _
      $region28: #{tpu_custom_call.1} parent=5 // pred_fallthru
        _
      %p223 = scmp.le.s32.totalorder 2, %s15
      // Predicated region
      $region41: #{tpu_custom_call.1} parent=5 // pred_check
        %p224 = pneg %p223
      $region42: #{tpu_custom_call.1} parent=5 // pred_check_branch
        %226 = sbr.rel (%p224) target = $region44
      $region43: #{tpu_custom_call.1} parent=5 // pred_region
        %s227 = ssub.s32 %s15, 2
        // Predicated region
        $region45: #{tpu_custom_call.1} parent=43 // pred_check
          %p228 = pneg %p107
        $region46: #{tpu_custom_call.1} parent=43 // pred_check_branch
          %230 = sbr.rel (%p228) target = $region48
        $region47: #{tpu_custom_call.1} parent=43 // pred_region
          %s231 = sand.u32 %s92, 1
          %s232 = scalar_lea.sflag [#allocation4], %s231
          %s233 = sand.u32 %s92, 1
          %s234 = smul.addr %s233, 2
          %s235 = scalar_lea.vmem [#allocation7], %s234
          %237 = dma.done %s232, 32
        $region48: #{tpu_custom_call.1} parent=43 // pred_fallthru
          _
      $region44: #{tpu_custom_call.1} parent=5 // pred_fallthru
        _
    $region6: #{tpu_custom_call.1} parent=1 // loop_footer
      %s19 = sadd.s32 1, %s15
    $region7: #{tpu_custom_call.1} parent=1 // loop_footer_branch
      %14 = sbr.rel target = $region3
    $region8: #{tpu_custom_call.1} parent=1 // loop_exit
      _
    %238 = vsyncpa [#allocation3], 1
    %s239 = scalar_lea.sflag [#allocation3], 1
    %240 = vsyncpa %s239, 1
    %241 = vsyncpa [#allocation6], 1
    %242 = vsyncpa [#allocation4], 1
    %s243 = scalar_lea.sflag [#allocation4], 1
    %244 = vsyncpa %s243, 1

</llo_original>
